<compile_context>
chip_gen: v7x
topology: tpu7x:2x2x1
jax: 0.10.0
libtpu: 0.0.40
codegen_flags: <defaults>
</compile_context>

<pallas_src>
import functools

import numpy as np
import jax
import jax.numpy as jnp
from jax.experimental import pallas as pl
from jax.experimental.pallas import tpu as pltpu

COCO_SIGMAS_17 = np.array(
    [.26, .25, .25, .35, .35, .79, .79, .72, .72, .62, .62,
     1.07, 1.07, .87, .87, .89, .89], dtype=np.float32) / 10.0


# ----------------------------- fused Pallas kernel -----------------------------

def _criterion_kernel(logits_ref, onehot_ref, tgt_len_ref, kp_ref, area_ref, invvar_ref,
                      out_ref, *, batch, num_cls, alpha, oks_eps, approx_recip):
    """One decoder layer per grid step.

    logits_ref : [1, B*C, Q] native dtype   (fused row f = b*C + c, queries on lanes)
    onehot_ref : [1, B*C, Q] native dtype   (precomputed target one-hot, background = 0)
    tgt_len_ref: [B, 1]      float32        (#targets per image, layer-invariant)
    kp_ref     : [1, 5, K, M] float32       (xp, yp, xg, yg, vis; instances on lanes)
    area_ref   : [1, 1, M]   float32        (0.5 / target area)
    invvar_ref : [K, 1]      float32        (1 / (2*sigma)^2, layer-invariant)
    out_ref    : [1, 1, 128] float32        lanes 0..3 = focal_sum, card_err, pose_sum, oks_mean
    """
    B, C = batch, num_cls
    x = logits_ref[0].astype(jnp.float32)          # [B*C, Q] (upcast after load)
    t = onehot_ref[0].astype(jnp.float32)          # [B*C, Q]
    BC, Q = x.shape

    # ---- sigmoid focal loss (gamma == 2): share e = exp(-|x|) ----
    e = jnp.exp(-jnp.abs(x))
    one_plus_e = 1.0 + e
    if approx_recip:
        inv_1pe = pl.reciprocal(one_plus_e, approx=True)     # EUP slot, ~free
    else:
        inv_1pe = 1.0 / one_plus_e                           # exactness toggle
    prob = jnp.where(x >= 0, inv_1pe, e * inv_1pe)           # sigmoid(x)
    ce = jnp.maximum(x, 0.0) - x * t + jnp.log(one_plus_e)   # stable BCE-with-logits
    p_t = prob * t + (1.0 - prob) * (1.0 - t)
    one_m = 1.0 - p_t
    focal = one_m * one_m * ce
    if alpha >= 0:                                           # static python branch
        focal = (alpha * t + (1.0 - alpha) * (1.0 - t)) * focal
    focal_sum = jnp.sum(focal)

    # ---- cardinality: #(argmax over classes != C-1) per image, L1 vs #targets ----
    # per-image masked maxes over the fused (b, c) sublane axis; B is small & static.
    row = jax.lax.broadcasted_iota(jnp.int32, (BC, Q), 0)
    err_acc = jnp.zeros((1, 1), jnp.float32)
    for b in range(B):
        last_sel = row == (b * C + C - 1)
        rest_sel = (row >= b * C) & (row < b * C + C - 1)
        last = jnp.max(jnp.where(last_sel, x, -jnp.inf), axis=0, keepdims=True)   # [1, Q]
        rest = jnp.max(jnp.where(rest_sel, x, -jnp.inf), axis=0, keepdims=True)   # [1, Q]
        card_b = jnp.sum((rest >= last).astype(jnp.float32), axis=1, keepdims=True)
        err_acc = err_acc + jnp.abs(card_b - tgt_len_ref[b:b + 1, :])
    card_err = jnp.sum(err_acc) / float(B)

    # ---- keypoints: visibility-weighted L1 + mean linear OKS loss ----
    kp = kp_ref[0].astype(jnp.float32)             # [5, K, M]
    xp, yp, xg, yg, vis = kp[0], kp[1], kp[2], kp[3], kp[4]
    dx = xp - xg
    dy = yp - yg
    pose_sum = jnp.sum((jnp.abs(dx) + jnp.abs(dy)) * vis)

    # scale = (0.5/area) * (1/var) == 1 / (area * var * 2); exact, no approx reciprocal.
    scale = invvar_ref[...] * area_ref[0]          # [K,1] * [1,M] -> [K,M]
    ex = jnp.exp(-(dx * dx + dy * dy) * scale)
    num = jnp.sum(ex * vis, axis=0, keepdims=True)         # [1, M]
    den = jnp.sum(vis, axis=0, keepdims=True) + 1e-6       # [1, M]
    oks = jnp.maximum(num / den, oks_eps)
    oks_mean = jnp.mean(1.0 - oks)                         # OKSLoss(linear, reduction='mean')

    # ---- pack the four per-layer scalars into one lane vector (lanes 0..3) ----
    lane = jax.lax.broadcasted_iota(jnp.int32, out_ref.shape, 2)
    out_ref[...] = jnp.where(lane == 0, focal_sum,
                   jnp.where(lane == 1, card_err,
                   jnp.where(lane == 2, pose_sum, oks_mean)))


def criterion_losses_pallas(logits_fused, onehot_fused, tgt_len, kp5, area_scale, inv_var,
                            *, num_cls, batch, focal_alpha, oks_eps, approx_recip=True):
    """Returns (focal_sums [L], card_errs [L], pose_sums [L], oks_means [L]) float32."""
    L, BC, Q = logits_fused.shape
    _, _, K, M = kp5.shape
    kernel = functools.partial(
        _criterion_kernel, batch=int(batch), num_cls=int(num_cls),
        alpha=float(focal_alpha), oks_eps=float(oks_eps), approx_recip=bool(approx_recip))

    grid_spec = pltpu.PrefetchScalarGridSpec(
        num_scalar_prefetch=0,
        grid=(L,),
        in_specs=[
            pl.BlockSpec((1, BC, Q), lambda l: (l, 0, 0)),
            pl.BlockSpec((1, BC, Q), lambda l: (l, 0, 0)),
            pl.BlockSpec((batch, 1), lambda l: (0, 0)),
            pl.BlockSpec((1, 5, K, M), lambda l: (l, 0, 0, 0)),
            pl.BlockSpec((1, 1, M), lambda l: (l, 0, 0)),
            pl.BlockSpec((K, 1), lambda l: (0, 0)),
        ],
        out_specs=pl.BlockSpec((1, 1, 128), lambda l: (l, 0, 0)),
    )
    itemsize = jnp.dtype(logits_fused.dtype).itemsize
    cost = pl.CostEstimate(
        flops=int(L * (BC * Q * 22 + K * M * 14 + 8 * M)),
        transcendentals=int(L * (BC * Q * 2 + K * M)),
        bytes_accessed=int(2 * L * BC * Q * itemsize + L * 5 * K * M * 4 + L * M * 4
                           + batch * 4 + K * 4 + L * 128 * 4),
    )
    res = pl.pallas_call(
        kernel,
        out_shape=jax.ShapeDtypeStruct((L, 1, 128), jnp.float32),
        grid_spec=grid_spec,
        compiler_params=pltpu.CompilerParams(dimension_semantics=("parallel",)),
        cost_estimate=cost,
    )(logits_fused, onehot_fused, tgt_len, kp5, area_scale, inv_var)
    return res[:, 0, 0], res[:, 0, 1], res[:, 0, 2], res[:, 0, 3]


# ----------------------------- matcher stub -----------------------------

def simple_matcher(outputs, targets):
    # TODO(synk): Hungarian assignment (scipy linear_sum_assignment) has no clean Pallas
    # equivalent; use deterministic identity matching (target j <-> query j) and a constant
    # cost-mean dict for this synthetic setup.
    indices = []
    for t in targets:
        n = int(t['labels'].shape[0])
        src = jnp.arange(n, dtype=jnp.int32)
        tgt = jnp.arange(n, dtype=jnp.int32)
        indices.append((src, tgt))
    cost_mean_dict = {
        'cost_class': jnp.float32(0.0),
        'cost_keypoints': jnp.float32(0.0),
        'cost_oks': jnp.float32(0.0),
    }
    return indices, cost_mean_dict


# ----------------------------- criterion -----------------------------

class SetCriterionPallas:
    """Forward-pass equivalent of GroupPose SetCriterion with one fused Pallas kernel."""

    def __init__(self, num_classes, matcher, weight_dict, focal_alpha, losses, num_body_points):
        self.num_classes = num_classes
        self.matcher = matcher
        self.weight_dict = weight_dict
        self.losses = losses
        self.focal_alpha = focal_alpha
        self.vis = 0.1
        self.abs = 1
        self.num_body_points = num_body_points
        self.oks_eps = 1e-6
        self.approx_recip = True          # exactness toggle for the in-kernel sigmoid
        if num_body_points == 17:
            sig = COCO_SIGMAS_17
        else:
            sig = np.full((num_body_points,), 0.05, dtype=np.float32)
        variances = (sig * 2.0) ** 2                        # (2*sigma)^2, [K]
        self.inv_variances = jnp.asarray(
            1.0 / variances, jnp.float32).reshape(num_body_points, 1)   # [K, 1]

    # ---- all loss families, all decoder layers, one pallas_call ----
    def _compute_losses(self, entries, targets, num_boxes):
        L = len(entries)
        B, Q, C = entries[0][1]['pred_logits'].shape
        K = self.num_body_points
        logits_dtype = entries[0][1]['pred_logits'].dtype
        need_kp = 'keypoints' in self.losses

        tgt_counts = [int(t['labels'].shape[0]) for t in targets]
        M = sum(tgt_counts)
        offsets = np.concatenate([[0], np.cumsum(tgt_counts)]).astype(np.int32)

        # ----- stacked matched indices (vectorized glue across layers) -----
        batch_idx_all = src_idx_all = lbl_all = tflat_all = None
        if M > 0:
            per_b, per_s, per_lbl, per_tf = [], [], [], []
            for _, _, indices, _ in entries:
                indices_ = indices[0]
                per_b.append(jnp.concatenate(
                    [jnp.full(src.shape, i, jnp.int32) for i, (src, _) in enumerate(indices_)]))
                per_s.append(jnp.concatenate(
                    [src.astype(jnp.int32) for src, _ in indices_]))
                per_lbl.append(jnp.concatenate(
                    [t['labels'][J].astype(jnp.int32) for t, (_, J) in zip(targets, indices_)]))
                per_tf.append(jnp.concatenate(
                    [offsets[i] + J.astype(jnp.int32) for i, (_, J) in enumerate(indices_)]))
            batch_idx_all = jnp.stack(per_b)          # [L, M]
            src_idx_all = jnp.stack(per_s)            # [L, M]
            lbl_all = jnp.stack(per_lbl)              # [L, M]
            tflat_all = jnp.stack(per_tf)             # [L, M]
        l_idx = jnp.arange(L, dtype=jnp.int32)[:, None]

        # ----- logits family inputs: [L, B*C, Q] logits + precomputed one-hot -----
        logits_all = jnp.stack([e[1]['pred_logits'] for e in entries], axis=0)   # [L,B,Q,C]
        logits_fused = jnp.transpose(logits_all, (0, 1, 3, 2)).reshape(L, B * C, Q)

        tc = jnp.full((L, B, Q), self.num_classes, jnp.int32)
        if M > 0:
            tc = tc.at[l_idx, batch_idx_all, src_idx_all].set(lbl_all)            # one scatter
        onehot = (tc[..., None] == jnp.arange(C, dtype=jnp.int32)).astype(logits_dtype)
        onehot_fused = jnp.transpose(onehot, (0, 1, 3, 2)).reshape(L, B * C, Q)
        tgt_len = jnp.asarray(tgt_counts, jnp.float32).reshape(B, 1)

        # ----- keypoint family inputs: [L, 5, K, M] + [L, 1, M] area row -----
        if need_kp and M > 0:
            pred_kp_all = jnp.stack([e[1]['pred_keypoints'] for e in entries], axis=0)  # [L,B,Q,3K]
            src_kp = pred_kp_all[l_idx, batch_idx_all, src_idx_all].astype(jnp.float32)  # [L,M,3K]
            flat_kp = jnp.concatenate([t['keypoints'] for t in targets], 0).astype(jnp.float32)
            flat_area = jnp.concatenate([t['area'] for t in targets], 0).astype(jnp.float32)
            tgt_kp = flat_kp[tflat_all]                                                  # [L,M,3K]
            tgt_area = flat_area[tflat_all]                                              # [L,M]
            zp = src_kp[..., :2 * K].reshape(L, M, K, 2)
            zg = tgt_kp[..., :2 * K].reshape(L, M, K, 2)
            vis = tgt_kp[..., 2 * K:]                                                    # [L,M,K]
            kp5 = jnp.stack([zp[..., 0], zp[..., 1], zg[..., 0], zg[..., 1], vis], axis=1)
            kp5 = jnp.transpose(kp5, (0, 1, 3, 2))                                       # [L,5,K,M]
            area_scale = (0.5 / tgt_area).reshape(L, 1, M)
        else:
            kp5 = jnp.zeros((L, 5, K, 1), jnp.float32)            # dummy (results discarded)
            area_scale = jnp.full((L, 1, 1), 0.5, jnp.float32)

        focal_sums, card_errs, pose_sums, oks_means = criterion_losses_pallas(
            logits_fused, onehot_fused, tgt_len, kp5, area_scale, self.inv_variances,
            num_cls=C, batch=B, focal_alpha=self.focal_alpha, oks_eps=self.oks_eps,
            approx_recip=self.approx_recip)

        losses = {}
        for li, (suffix, layer_out, _, log) in enumerate(entries):
            if 'labels' in self.losses:
                # sigmoid_focal_loss == sum/Q/num_boxes, then * Q  ==>  sum / num_boxes
                losses[f'loss_ce{suffix}'] = focal_sums[li] / num_boxes
                if log:
                    if M == 0:
                        class_error = jnp.float32(100.0)
                    else:
                        bi, si, tco = batch_idx_all[li], src_idx_all[li], lbl_all[li]
                        matched = layer_out['pred_logits'][bi, si].astype(jnp.float32)
                        acc = 100.0 * jnp.mean(
                            (jnp.argmax(matched, axis=-1) == tco).astype(jnp.float32))
                        class_error = 100.0 - acc
                    losses[f'class_error{suffix}'] = class_error
            if 'cardinality' in self.losses:
                losses[f'cardinality_error{suffix}'] = card_errs[li]
            if need_kp:
                if M == 0:
                    losses[f'loss_keypoints{suffix}'] = jnp.float32(0.0)
                    losses[f'loss_oks{suffix}'] = jnp.float32(0.0)
                else:
                    losses[f'loss_keypoints{suffix}'] = pose_sums[li] / num_boxes
                    losses[f'loss_oks{suffix}'] = oks_means[li] / num_boxes
        return losses

    # ---- forward ----
    def forward(self, outputs, targets):
        outputs_without_aux = {k: v for k, v in outputs.items() if k != 'aux_outputs'}
        num_boxes = sum(int(t['labels'].shape[0]) for t in targets)
        num_boxes = float(max(num_boxes, 1))
        # TODO(synk): distributed all_reduce of num_boxes omitted (single host, world size 1).

        for name in self.losses:
            assert name in ('labels', 'cardinality', 'keypoints', 'matching'), \
                f'do you really want to compute {name} loss?'

        # (suffix, layer_outputs, matcher result, log) for final + aux + interm layers.
        entries = [('', outputs_without_aux, self.matcher(outputs_without_aux, targets), True)]
        if 'aux_outputs' in outputs:
            for idx, aux_outputs in enumerate(outputs['aux_outputs']):
                entries.append((f'_{idx}', aux_outputs,
                                self.matcher(aux_outputs, targets), False))
        if 'interm_outputs' in outputs:
            interm_outputs = outputs['interm_outputs']
            entries.append(('_interm', interm_outputs,
                            self.matcher(interm_outputs, targets), False))

        losses = {}
        if any(n in self.losses for n in ('labels', 'cardinality', 'keypoints')):
            losses.update(self._compute_losses(entries, targets, num_boxes))
        if 'matching' in self.losses:
            for suffix, _, indices, _ in entries:
                cost_mean_dict = indices[1]
                losses.update({f'set_{k}{suffix}': v for k, v in cost_mean_dict.items()})
        return losses

    __call__ = forward


# ----------------------------- demo -----------------------------

if __name__ == "__main__":
    key = jax.random.PRNGKey(0)
    B, Q, C, K = 2, 16, 2, 17       # batch, queries, classes, body points
    n_tgt = 3                       # targets per image (fixed for the synthetic example)
    n_aux = 2                       # aux decoder layers

    keys = jax.random.split(key, 8)

    def make_layer(k):
        k1, k2 = jax.random.split(k)
        return {'pred_logits': jax.random.normal(k1, (B, Q, C), jnp.float32),
                'pred_keypoints': jax.random.uniform(k2, (B, Q, 3 * K), jnp.float32)}

    outputs = make_layer(keys[0])
    outputs['aux_outputs'] = [make_layer(keys[1 + i]) for i in range(n_aux)]
    outputs['interm_outputs'] = make_layer(keys[1 + n_aux])

    targets = []
    for b in range(B):
        kb = jax.random.fold_in(keys[4], b)
        kl, kp, kv, ka = jax.random.split(kb, 4)
        labels = jax.random.randint(kl, (n_tgt,), 0, C, dtype=jnp.int32)
        kps_xy = jax.random.uniform(kp, (n_tgt, 2 * K), jnp.float32)
        vis = (jax.random.uniform(kv, (n_tgt, K)) > 0.3).astype(jnp.float32)
        kps = jnp.concatenate([kps_xy, vis], axis=1)
        area = jax.random.uniform(ka, (n_tgt,), jnp.float32, 0.1, 1.0)
        targets.append({'labels': labels, 'keypoints': kps, 'area': area})

    criterion = SetCriterionPallas(
        num_classes=C,
        matcher=simple_matcher,
        weight_dict={'loss_ce': 2.0, 'loss_keypoints': 10.0, 'loss_oks': 4.0},
        focal_alpha=0.25,
        losses=['labels', 'keypoints', 'cardinality', 'matching'],
        num_body_points=K)

    losses = criterion.forward(outputs, targets)

    for v in jax.tree_util.tree_leaves(losses):
        if isinstance(v, jax.Array):
            jax.block_until_ready(v)

    print("KERNEL_OK")
</pallas_src>

<mosaic_0001>
module attributes {stable_mosaic.version = 11 : i64} {
  func.func @_criterion_kernel(%arg0: i32, %arg1: memref<1x4x16xf32, #tpu.memory_space<vmem>>, %arg2: memref<1x4x16xf32, #tpu.memory_space<vmem>>, %arg3: memref<2x1xf32, #tpu.memory_space<vmem>>, %arg4: memref<1x5x17x6xf32, #tpu.memory_space<vmem>>, %arg5: memref<1x1x6xf32, #tpu.memory_space<vmem>>, %arg6: memref<17x1xf32, #tpu.memory_space<vmem>>, %arg7: memref<1x1x128xf32, #tpu.memory_space<vmem>>) attributes {dimension_semantics = [#tpu.dimension_semantics<parallel>], iteration_bounds = array<i64: 4>, scalar_prefetch = 0 : i64, scratch_operands = 0 : i64, tpu.core_type = #tpu.core_type<tc>, window_params = [{transform_indices = @transform_0, window_bounds = array<i64: 1, 4, 16>}, {transform_indices = @transform_1, window_bounds = array<i64: 1, 4, 16>}, {pipeline_mode = #tpu.pipeline_mode<synchronous>, transform_indices = @transform_2, window_bounds = array<i64: 2, 1>}, {transform_indices = @transform_3, window_bounds = array<i64: 1, 5, 17, 6>}, {transform_indices = @transform_4, window_bounds = array<i64: 1, 1, 6>}, {pipeline_mode = #tpu.pipeline_mode<synchronous>, transform_indices = @transform_5, window_bounds = array<i64: 17, 1>}, {transform_indices = @transform_6, window_bounds = array<i64: 1, 1, 128>}]} {
    %c0 = arith.constant 0 : index
    %c0_0 = arith.constant 0 : index
    %c0_1 = arith.constant 0 : index
    %0 = vector.load %arg1[%c0, %c0_0, %c0_1] : memref<1x4x16xf32, #tpu.memory_space<vmem>>, vector<1x4x16xf32>
    %1 = vector.shape_cast %0 : vector<1x4x16xf32> to vector<4x16xf32>
    %c0_2 = arith.constant 0 : index
    %c0_3 = arith.constant 0 : index
    %c0_4 = arith.constant 0 : index
    %2 = vector.load %arg2[%c0_2, %c0_3, %c0_4] : memref<1x4x16xf32, #tpu.memory_space<vmem>>, vector<1x4x16xf32>
    %3 = vector.shape_cast %2 : vector<1x4x16xf32> to vector<4x16xf32>
    %4 = math.absf %1 : vector<4x16xf32>
    %cst = arith.constant 0.000000e+00 : f32
    %5 = vector.broadcast %cst : f32 to vector<4x16xf32>
    %6 = arith.subf %5, %4 : vector<4x16xf32>
    %7 = math.exp %6 : vector<4x16xf32>
    %cst_5 = arith.constant 1.000000e+00 : f32
    %8 = vector.broadcast %cst_5 : f32 to vector<4x16xf32>
    %9 = arith.addf %8, %7 : vector<4x16xf32>
    %10 = tpu.reciprocal %9 {approx = true} : vector<4x16xf32> -> vector<4x16xf32>
    %cst_6 = arith.constant 0.000000e+00 : f32
    %11 = vector.broadcast %cst_6 : f32 to vector<4x16xf32>
    %12 = arith.cmpf oge, %1, %11 : vector<4x16xf32>
    %13 = arith.mulf %7, %10 : vector<4x16xf32>
    %14 = arith.select %12, %10, %13 : vector<4x16xi1>, vector<4x16xf32>
    %cst_7 = arith.constant 0.000000e+00 : f32
    %15 = vector.broadcast %cst_7 : f32 to vector<4x16xf32>
    %16 = arith.maximumf %1, %15 : vector<4x16xf32>
    %17 = arith.mulf %1, %3 : vector<4x16xf32>
    %18 = arith.subf %16, %17 : vector<4x16xf32>
    %19 = math.log %9 : vector<4x16xf32>
    %20 = arith.addf %18, %19 : vector<4x16xf32>
    %21 = arith.mulf %14, %3 : vector<4x16xf32>
    %cst_8 = arith.constant 1.000000e+00 : f32
    %22 = vector.broadcast %cst_8 : f32 to vector<4x16xf32>
    %23 = arith.subf %22, %14 : vector<4x16xf32>
    %cst_9 = arith.constant 1.000000e+00 : f32
    %24 = vector.broadcast %cst_9 : f32 to vector<4x16xf32>
    %25 = arith.subf %24, %3 : vector<4x16xf32>
    %26 = arith.mulf %23, %25 : vector<4x16xf32>
    %27 = arith.addf %21, %26 : vector<4x16xf32>
    %cst_10 = arith.constant 1.000000e+00 : f32
    %28 = vector.broadcast %cst_10 : f32 to vector<4x16xf32>
    %29 = arith.subf %28, %27 : vector<4x16xf32>
    %30 = arith.mulf %29, %29 : vector<4x16xf32>
    %31 = arith.mulf %30, %20 : vector<4x16xf32>
    %cst_11 = arith.constant 2.500000e-01 : f32
    %32 = vector.broadcast %cst_11 : f32 to vector<4x16xf32>
    %33 = arith.mulf %32, %3 : vector<4x16xf32>
    %cst_12 = arith.constant 1.000000e+00 : f32
    %34 = vector.broadcast %cst_12 : f32 to vector<4x16xf32>
    %35 = arith.subf %34, %3 : vector<4x16xf32>
    %cst_13 = arith.constant 7.500000e-01 : f32
    %36 = vector.broadcast %cst_13 : f32 to vector<4x16xf32>
    %37 = arith.mulf %36, %35 : vector<4x16xf32>
    %38 = arith.addf %33, %37 : vector<4x16xf32>
    %39 = arith.mulf %38, %31 : vector<4x16xf32>
    %40 = vector.shape_cast %39 : vector<4x16xf32> to vector<1x4x16xf32>
    %cst_14 = arith.constant dense<0.000000e+00> : vector<1xf32>
    %41 = vector.multi_reduction <add>, %40, %cst_14 [1, 2] : vector<1x4x16xf32> to vector<1xf32>
    %42 = vector.shape_cast %41 : vector<1xf32> to vector<1x1x1xf32>
    %43 = vector.extract %42[0, 0, 0] : f32 from vector<1x1x1xf32>
    %44 = tpu.iota {dimensions = array<i32: 0>} : vector<4x16xi32>
    %cst_15 = arith.constant 0.000000e+00 : f32
    %45 = vector.broadcast %cst_15 : f32 to vector<1x1xf32>
    %c1_i32 = arith.constant 1 : i32
    %46 = vector.broadcast %c1_i32 : i32 to vector<4x16xi32>
    %47 = arith.cmpi eq, %44, %46 : vector<4x16xi32>
    %c0_i32 = arith.constant 0 : i32
    %48 = vector.broadcast %c0_i32 : i32 to vector<4x16xi32>
    %49 = arith.cmpi sge, %44, %48 : vector<4x16xi32>
    %c1_i32_16 = arith.constant 1 : i32
    %50 = vector.broadcast %c1_i32_16 : i32 to vector<4x16xi32>
    %51 = arith.cmpi slt, %44, %50 : vector<4x16xi32>
    %52 = arith.andi %49, %51 : vector<4x16xi1>
    %cst_17 = arith.constant 0xFF800000 : f32
    %53 = vector.broadcast %cst_17 : f32 to vector<4x16xf32>
    %54 = arith.select %47, %1, %53 : vector<4x16xi1>, vector<4x16xf32>
    %cst_18 = arith.constant dense<0xFF800000> : vector<16xf32>
    %55 = vector.multi_reduction <maximumf>, %54, %cst_18 [0] : vector<4x16xf32> to vector<16xf32>
    %56 = vector.shape_cast %55 : vector<16xf32> to vector<1x16xf32>
    %cst_19 = arith.constant 0xFF800000 : f32
    %57 = vector.broadcast %cst_19 : f32 to vector<4x16xf32>
    %58 = arith.select %52, %1, %57 : vector<4x16xi1>, vector<4x16xf32>
    %cst_20 = arith.constant dense<0xFF800000> : vector<16xf32>
    %59 = vector.multi_reduction <maximumf>, %58, %cst_20 [0] : vector<4x16xf32> to vector<16xf32>
    %60 = vector.shape_cast %59 : vector<16xf32> to vector<1x16xf32>
    %61 = arith.cmpf oge, %60, %56 : vector<1x16xf32>
    %62 = arith.extui %61 : vector<1x16xi1> to vector<1x16xi32>
    %63 = arith.sitofp %62 : vector<1x16xi32> to vector<1x16xf32>
    %cst_21 = arith.constant dense<0.000000e+00> : vector<1xf32>
    %64 = vector.multi_reduction <add>, %63, %cst_21 [1] : vector<1x16xf32> to vector<1xf32>
    %65 = vector.shape_cast %64 : vector<1xf32> to vector<1x1xf32>
    %c0_22 = arith.constant 0 : index
    %c0_23 = arith.constant 0 : index
    %66 = vector.load %arg3[%c0_22, %c0_23] : memref<2x1xf32, #tpu.memory_space<vmem>>, vector<1x1xf32>
    %67 = arith.subf %65, %66 : vector<1x1xf32>
    %68 = math.absf %67 : vector<1x1xf32>
    %69 = arith.addf %45, %68 : vector<1x1xf32>
    %c3_i32 = arith.constant 3 : i32
    %70 = vector.broadcast %c3_i32 : i32 to vector<4x16xi32>
    %71 = arith.cmpi eq, %44, %70 : vector<4x16xi32>
    %c2_i32 = arith.constant 2 : i32
    %72 = vector.broadcast %c2_i32 : i32 to vector<4x16xi32>
    %73 = arith.cmpi sge, %44, %72 : vector<4x16xi32>
    %c3_i32_24 = arith.constant 3 : i32
    %74 = vector.broadcast %c3_i32_24 : i32 to vector<4x16xi32>
    %75 = arith.cmpi slt, %44, %74 : vector<4x16xi32>
    %76 = arith.andi %73, %75 : vector<4x16xi1>
    %cst_25 = arith.constant 0xFF800000 : f32
    %77 = vector.broadcast %cst_25 : f32 to vector<4x16xf32>
    %78 = arith.select %71, %1, %77 : vector<4x16xi1>, vector<4x16xf32>
    %cst_26 = arith.constant dense<0xFF800000> : vector<16xf32>
    %79 = vector.multi_reduction <maximumf>, %78, %cst_26 [0] : vector<4x16xf32> to vector<16xf32>
    %80 = vector.shape_cast %79 : vector<16xf32> to vector<1x16xf32>
    %cst_27 = arith.constant 0xFF800000 : f32
    %81 = vector.broadcast %cst_27 : f32 to vector<4x16xf32>
    %82 = arith.select %76, %1, %81 : vector<4x16xi1>, vector<4x16xf32>
    %cst_28 = arith.constant dense<0xFF800000> : vector<16xf32>
    %83 = vector.multi_reduction <maximumf>, %82, %cst_28 [0] : vector<4x16xf32> to vector<16xf32>
    %84 = vector.shape_cast %83 : vector<16xf32> to vector<1x16xf32>
    %85 = arith.cmpf oge, %84, %80 : vector<1x16xf32>
    %86 = arith.extui %85 : vector<1x16xi1> to vector<1x16xi32>
    %87 = arith.sitofp %86 : vector<1x16xi32> to vector<1x16xf32>
    %cst_29 = arith.constant dense<0.000000e+00> : vector<1xf32>
    %88 = vector.multi_reduction <add>, %87, %cst_29 [1] : vector<1x16xf32> to vector<1xf32>
    %89 = vector.shape_cast %88 : vector<1xf32> to vector<1x1xf32>
    %c1 = arith.constant 1 : index
    %c0_30 = arith.constant 0 : index
    %90 = vector.load %arg3[%c1, %c0_30] : memref<2x1xf32, #tpu.memory_space<vmem>>, vector<1x1xf32>
    %91 = arith.subf %89, %90 : vector<1x1xf32>
    %92 = math.absf %91 : vector<1x1xf32>
    %93 = arith.addf %69, %92 : vector<1x1xf32>
    %94 = vector.shape_cast %93 : vector<1x1xf32> to vector<1x1x1xf32>
    %cst_31 = arith.constant dense<0.000000e+00> : vector<1xf32>
    %95 = vector.multi_reduction <add>, %94, %cst_31 [1, 2] : vector<1x1x1xf32> to vector<1xf32>
    %96 = vector.shape_cast %95 : vector<1xf32> to vector<1x1x1xf32>
    %97 = vector.extract %96[0, 0, 0] : f32 from vector<1x1x1xf32>
    %cst_32 = arith.constant 2.000000e+00 : f32
    %98 = arith.divf %97, %cst_32 : f32
    %c0_33 = arith.constant 0 : index
    %c0_34 = arith.constant 0 : index
    %c0_35 = arith.constant 0 : index
    %c0_36 = arith.constant 0 : index
    %99 = vector.load %arg4[%c0_33, %c0_34, %c0_35, %c0_36] : memref<1x5x17x6xf32, #tpu.memory_space<vmem>>, vector<1x5x17x6xf32>
    %100 = vector.shape_cast %99 : vector<1x5x17x6xf32> to vector<5x17x6xf32>
    %101 = vector.extract_strided_slice %100 {offsets = [0, 0, 0], sizes = [1, 17, 6], strides = [1, 1, 1]} : vector<5x17x6xf32> to vector<1x17x6xf32>
    %102 = vector.shape_cast %101 : vector<1x17x6xf32> to vector<17x6xf32>
    %103 = vector.extract_strided_slice %100 {offsets = [1, 0, 0], sizes = [1, 17, 6], strides = [1, 1, 1]} : vector<5x17x6xf32> to vector<1x17x6xf32>
    %104 = vector.shape_cast %103 : vector<1x17x6xf32> to vector<17x6xf32>
    %105 = vector.extract_strided_slice %100 {offsets = [2, 0, 0], sizes = [1, 17, 6], strides = [1, 1, 1]} : vector<5x17x6xf32> to vector<1x17x6xf32>
    %106 = vector.shape_cast %105 : vector<1x17x6xf32> to vector<17x6xf32>
    %107 = vector.extract_strided_slice %100 {offsets = [3, 0, 0], sizes = [1, 17, 6], strides = [1, 1, 1]} : vector<5x17x6xf32> to vector<1x17x6xf32>
    %108 = vector.shape_cast %107 : vector<1x17x6xf32> to vector<17x6xf32>
    %109 = vector.extract_strided_slice %100 {offsets = [4, 0, 0], sizes = [1, 17, 6], strides = [1, 1, 1]} : vector<5x17x6xf32> to vector<1x17x6xf32>
    %110 = vector.shape_cast %109 : vector<1x17x6xf32> to vector<17x6xf32>
    %111 = arith.subf %102, %106 : vector<17x6xf32>
    %112 = arith.subf %104, %108 : vector<17x6xf32>
    %113 = math.absf %111 : vector<17x6xf32>
    %114 = math.absf %112 : vector<17x6xf32>
    %115 = arith.addf %113, %114 : vector<17x6xf32>
    %116 = arith.mulf %115, %110 : vector<17x6xf32>
    %117 = vector.shape_cast %116 : vector<17x6xf32> to vector<1x17x6xf32>
    %cst_37 = arith.constant dense<0.000000e+00> : vector<1xf32>
    %118 = vector.multi_reduction <add>, %117, %cst_37 [1, 2] : vector<1x17x6xf32> to vector<1xf32>
    %119 = vector.shape_cast %118 : vector<1xf32> to vector<1x1x1xf32>
    %120 = vector.extract %119[0, 0, 0] : f32 from vector<1x1x1xf32>
    %c0_38 = arith.constant 0 : index
    %c0_39 = arith.constant 0 : index
    %121 = vector.load %arg6[%c0_38, %c0_39] : memref<17x1xf32, #tpu.memory_space<vmem>>, vector<17x1xf32>
    %c0_40 = arith.constant 0 : index
    %c0_41 = arith.constant 0 : index
    %c0_42 = arith.constant 0 : index
    %122 = vector.load %arg5[%c0_40, %c0_41, %c0_42] : memref<1x1x6xf32, #tpu.memory_space<vmem>>, vector<1x1x6xf32>
    %123 = vector.shape_cast %122 : vector<1x1x6xf32> to vector<1x6xf32>
    %124 = vector.broadcast %121 : vector<17x1xf32> to vector<17x6xf32>
    %125 = vector.broadcast %123 : vector<1x6xf32> to vector<17x6xf32>
    %126 = arith.mulf %124, %125 : vector<17x6xf32>
    %127 = arith.mulf %111, %111 : vector<17x6xf32>
    %128 = arith.mulf %112, %112 : vector<17x6xf32>
    %129 = arith.addf %127, %128 : vector<17x6xf32>
    %cst_43 = arith.constant 0.000000e+00 : f32
    %130 = vector.broadcast %cst_43 : f32 to vector<17x6xf32>
    %131 = arith.subf %130, %129 : vector<17x6xf32>
    %132 = arith.mulf %131, %126 : vector<17x6xf32>
    %133 = math.exp %132 : vector<17x6xf32>
    %134 = arith.mulf %133, %110 : vector<17x6xf32>
    %cst_44 = arith.constant dense<0.000000e+00> : vector<6xf32>
    %135 = vector.multi_reduction <add>, %134, %cst_44 [0] : vector<17x6xf32> to vector<6xf32>
    %136 = vector.shape_cast %135 : vector<6xf32> to vector<1x6xf32>
    %cst_45 = arith.constant dense<0.000000e+00> : vector<6xf32>
    %137 = vector.multi_reduction <add>, %110, %cst_45 [0] : vector<17x6xf32> to vector<6xf32>
    %138 = vector.shape_cast %137 : vector<6xf32> to vector<1x6xf32>
    %cst_46 = arith.constant 9.99999997E-7 : f32
    %139 = vector.broadcast %cst_46 : f32 to vector<1x6xf32>
    %140 = arith.addf %138, %139 : vector<1x6xf32>
    %141 = arith.divf %136, %140 : vector<1x6xf32>
    %cst_47 = arith.constant 9.99999997E-7 : f32
    %142 = vector.broadcast %cst_47 : f32 to vector<1x6xf32>
    %143 = arith.maximumf %141, %142 : vector<1x6xf32>
    %cst_48 = arith.constant 1.000000e+00 : f32
    %144 = vector.broadcast %cst_48 : f32 to vector<1x6xf32>
    %145 = arith.subf %144, %143 : vector<1x6xf32>
    %146 = vector.shape_cast %145 : vector<1x6xf32> to vector<1x1x6xf32>
    %cst_49 = arith.constant dense<0.000000e+00> : vector<1xf32>
    %147 = vector.multi_reduction <add>, %146, %cst_49 [1, 2] : vector<1x1x6xf32> to vector<1xf32>
    %148 = vector.shape_cast %147 : vector<1xf32> to vector<1x1x1xf32>
    %149 = vector.extract %148[0, 0, 0] : f32 from vector<1x1x1xf32>
    %cst_50 = arith.constant 6.000000e+00 : f32
    %150 = arith.divf %149, %cst_50 : f32
    %151 = tpu.iota {dimensions = array<i32: 2>} : vector<1x1x128xi32>
    %c0_i32_51 = arith.constant 0 : i32
    %152 = vector.broadcast %c0_i32_51 : i32 to vector<1x1x128xi32>
    %153 = arith.cmpi eq, %151, %152 : vector<1x1x128xi32>
    %c1_i32_52 = arith.constant 1 : i32
    %154 = vector.broadcast %c1_i32_52 : i32 to vector<1x1x128xi32>
    %155 = arith.cmpi eq, %151, %154 : vector<1x1x128xi32>
    %c2_i32_53 = arith.constant 2 : i32
    %156 = vector.broadcast %c2_i32_53 : i32 to vector<1x1x128xi32>
    %157 = arith.cmpi eq, %151, %156 : vector<1x1x128xi32>
    %158 = vector.broadcast %120 : f32 to vector<1x1x128xf32>
    %159 = vector.broadcast %150 : f32 to vector<1x1x128xf32>
    %160 = arith.select %157, %158, %159 : vector<1x1x128xi1>, vector<1x1x128xf32>
    %161 = vector.broadcast %98 : f32 to vector<1x1x128xf32>
    %162 = arith.select %155, %161, %160 : vector<1x1x128xi1>, vector<1x1x128xf32>
    %163 = vector.broadcast %43 : f32 to vector<1x1x128xf32>
    %164 = arith.select %153, %163, %162 : vector<1x1x128xi1>, vector<1x1x128xf32>
    %c0_54 = arith.constant 0 : index
    %c0_55 = arith.constant 0 : index
    %c0_56 = arith.constant 0 : index
    %165 = vector.load %arg7[%c0_54, %c0_55, %c0_56] : memref<1x1x128xf32, #tpu.memory_space<vmem>>, vector<1x1x128xf32>
    tpu.vector_store %arg7[%c0_54, %c0_55, %c0_56], %164 {strides = array<i32>} : memref<1x1x128xf32, #tpu.memory_space<vmem>>, vector<1x1x128xf32>,
    return
  }
  func.func @transform_0(%arg0: i32) -> (i32, i32, i32) {
    %c0_i32 = arith.constant 0 : i32
    %c0_i32_0 = arith.constant 0 : i32
    %c0_i32_1 = arith.constant 0 : i32
    return %arg0, %c0_i32, %c0_i32_0 : i32, i32, i32
  }
  func.func @transform_1(%arg0: i32) -> (i32, i32, i32) {
    %c0_i32 = arith.constant 0 : i32
    %c0_i32_0 = arith.constant 0 : i32
    %c0_i32_1 = arith.constant 0 : i32
    return %arg0, %c0_i32, %c0_i32_0 : i32, i32, i32
  }
  func.func @transform_2(%arg0: i32) -> (i32, i32) {
    %c0_i32 = arith.constant 0 : i32
    %c0_i32_0 = arith.constant 0 : i32
    %c0_i32_1 = arith.constant 0 : i32
    return %c0_i32, %c0_i32_0 : i32, i32
  }
  func.func @transform_3(%arg0: i32) -> (i32, i32, i32, i32) {
    %c0_i32 = arith.constant 0 : i32
    %c0_i32_0 = arith.constant 0 : i32
    %c0_i32_1 = arith.constant 0 : i32
    %c0_i32_2 = arith.constant 0 : i32
    return %arg0, %c0_i32, %c0_i32_0, %c0_i32_1 : i32, i32, i32, i32
  }
  func.func @transform_4(%arg0: i32) -> (i32, i32, i32) {
    %c0_i32 = arith.constant 0 : i32
    %c0_i32_0 = arith.constant 0 : i32
    %c0_i32_1 = arith.constant 0 : i32
    return %arg0, %c0_i32, %c0_i32_0 : i32, i32, i32
  }
  func.func @transform_5(%arg0: i32) -> (i32, i32) {
    %c0_i32 = arith.constant 0 : i32
    %c0_i32_0 = arith.constant 0 : i32
    %c0_i32_1 = arith.constant 0 : i32
    return %c0_i32, %c0_i32_0 : i32, i32
  }
  func.func @transform_6(%arg0: i32) -> (i32, i32, i32) {
    %c0_i32 = arith.constant 0 : i32
    %c0_i32_0 = arith.constant 0 : i32
    %c0_i32_1 = arith.constant 0 : i32
    return %arg0, %c0_i32, %c0_i32_0 : i32, i32, i32
  }
}

</mosaic_0001>

<llo_original>
// kernel: tpu_custom_call.1
$region0: #{tpu_custom_call.1}
  #allocation0 [shape = 'u32[]', space=smem, size = 0x4, offset = 0x4, fixed_abs, tag = 'smem constant byte address 0x4 - core index']
  #allocation1 [shape = 'u32[144,128]{1,0:T(1,128)}', space=vmem, size = 0x12000, scoped, tag = 'internal scratch']
  %s0 = inlined_call_operand.vmem [shape: f32[4,4,16], index: 0, kind: input, shape index: {}]
  %s1 = inlined_call_operand.vmem [shape: f32[4,4,16], index: 1, kind: input, shape index: {}]
  %s2 = inlined_call_operand.vmem [shape: f32[2,1], index: 2, kind: input, shape index: {}]
  %s3 = inlined_call_operand.vmem [shape: f32[4,5,17,6], index: 3, kind: input, shape index: {}]
  %s4 = inlined_call_operand.vmem [shape: f32[4,1,6], index: 4, kind: input, shape index: {}]
  %s5 = inlined_call_operand.vmem [shape: f32[17,1], index: 5, kind: input, shape index: {}]
  %s6 = inlined_call_operand.hbm [shape: f32[4,1,128], index: 6, kind: output, shape index: {}]
  %s7 = sld [smem:[#allocation0]]
  $region57: #{tpu_custom_call.1} parent=0
    _
  %s9 = ssub.s32 1, %s7
  %s10 = scalar_select 0, %s9, %s7
  $region1: #{tpu_custom_call.1} parent=0
    #allocation2 [shape = 'u8[1024]{0}', space=vmem, size = 0x400, scoped, tag = 'output window, operand 0']
    #allocation3 [shape = 's32[2]{0}', space=sflag, size = 0x8, scoped, tag = 'scoped memory for tpu_custom_call.1']
    %11 = vsyncpa [#allocation3], 0
    %s12 = scalar_lea.sflag [#allocation3], 1
    %13 = vsyncpa %s12, 0
    loop: start=0, step=1, limit=6
    $region2: #{tpu_custom_call.1} parent=1 // loop_pre_header
      _
    $region3: #{tpu_custom_call.1} parent=1 // loop_header
      %s15 = sphi 0, %s19
      %p16 = scmp.ge.s32.totalorder %s15, 6
      %s25 = sphi 0, %s27
      %s28 = sphi 0, %s25
      %s29 = sphi 0, %s28
      %s45 = sphi 0, %s29
      %s51 = sphi 0, %s53
      %s54 = sphi 0, %s51
      %s55 = sphi 0, %s54
      %s71 = sphi 0, %s55
      %s75 = sphi 0, %s75
      %s77 = sphi 0, %s75
      %s78 = sphi 0, %s77
      %s92 = sphi 0, %s78
      %s98 = sphi 0, %s100
      %s101 = sphi 0, %s98
      %s102 = sphi 0, %s101
      %s118 = sphi 0, %s102
      %s124 = sphi 0, %s126
      %s127 = sphi 0, %s124
      %s128 = sphi 0, %s127
      %s144 = sphi 0, %s128
      %s148 = sphi 0, %s148
      %s150 = sphi 0, %s148
      %s151 = sphi 0, %s150
      %s165 = sphi 0, %s151
      %s171 = sphi 0, %s173
      %s174 = sphi 0, %s171
      %s175 = sphi 0, %s174
      %s191 = sphi 0, %s175
    $region4: #{tpu_custom_call.1} parent=1 // loop_header_branch
      %18 = sbr.rel (%p16) target = $region8
    $region5: #{tpu_custom_call.1} parent=1 // loop_body
      %s20 = ssub.s32 %s15, 1
      %s21 = ssub.s32 %s15, 2
      %s22 = sadd.s32 %s15, 1
      %s23 = ssub.s32 %s15, %s22
      %p24 = scmp.eq.s32.totalorder %s23, 0
      %s26 = sadd.s32 %s25, 1
      %s27 = scalar_select %p24, %s25, %s26
      %p30 = pneg %p24
      %p31 = scmp.eq.s32.totalorder %s15, 3
      %p32 = por %p30, %p31
      %p33 = scmp.ne.s32.totalorder %s25, %s28
      %p34 = scmp.eq.s32.totalorder %s15, 0
      %p35 = por %p33, %p34
      %p36 = scmp.ne.s32.totalorder %s25, %s28
      %p37 = scmp.eq.s32.totalorder %s20, 3
      %p38 = por %p36, %p37
      %p39 = scmp.ne.s32.totalorder %s28, %s29
      %p40 = scmp.eq.s32.totalorder %s20, 0
      %p41 = por %p39, %p40
      %p42 = scmp.ne.s32.totalorder %s28, %s29
      %p43 = scmp.eq.s32.totalorder %s21, 3
      %p44 = por %p42, %p43
      %p46 = scmp.ne.s32.totalorder %s29, %s45
      %p47 = scmp.eq.s32.totalorder %s21, 0
      %p48 = por %p46, %p47
      %s49 = ssub.s32 %s15, %s22
      %p50 = scmp.eq.s32.totalorder %s49, 0
      %s52 = sadd.s32 %s51, 1
      %s53 = scalar_select %p50, %s51, %s52
      %p56 = pneg %p50
      %p57 = scmp.eq.s32.totalorder %s15, 3
      %p58 = por %p56, %p57
      %p59 = scmp.ne.s32.totalorder %s51, %s54
      %p60 = scmp.eq.s32.totalorder %s15, 0
      %p61 = por %p59, %p60
      %p62 = scmp.ne.s32.totalorder %s51, %s54
      %p63 = scmp.eq.s32.totalorder %s20, 3
      %p64 = por %p62, %p63
      %p65 = scmp.ne.s32.totalorder %s54, %s55
      %p66 = scmp.eq.s32.totalorder %s20, 0
      %p67 = por %p65, %p66
      %p68 = scmp.ne.s32.totalorder %s54, %s55
      %p69 = scmp.eq.s32.totalorder %s21, 3
      %p70 = por %p68, %p69
      %p72 = scmp.ne.s32.totalorder %s55, %s71
      %p73 = scmp.eq.s32.totalorder %s21, 0
      %p74 = por %p72, %p73
      %s76 = sadd.s32 %s75, 1
      %p79 = scmp.eq.s32.totalorder %s15, 3
      %p80 = scmp.ne.s32.totalorder %s75, %s77
      %p81 = scmp.eq.s32.totalorder %s15, 0
      %p82 = por %p80, %p81
      %p83 = scmp.ne.s32.totalorder %s75, %s77
      %p84 = scmp.eq.s32.totalorder %s20, 3
      %p85 = por %p83, %p84
      %p86 = scmp.ne.s32.totalorder %s77, %s78
      %p87 = scmp.eq.s32.totalorder %s20, 0
      %p88 = por %p86, %p87
      %p89 = scmp.ne.s32.totalorder %s77, %s78
      %p90 = scmp.eq.s32.totalorder %s21, 3
      %p91 = por %p89, %p90
      %p93 = scmp.ne.s32.totalorder %s78, %s92
      %p94 = scmp.eq.s32.totalorder %s21, 0
      %p95 = por %p93, %p94
      %s96 = ssub.s32 %s15, %s22
      %p97 = scmp.eq.s32.totalorder %s96, 0
      %s99 = sadd.s32 %s98, 1
      %s100 = scalar_select %p97, %s98, %s99
      %p103 = pneg %p97
      %p104 = scmp.eq.s32.totalorder %s15, 3
      %p105 = por %p103, %p104
      %p106 = scmp.ne.s32.totalorder %s98, %s101
      %p107 = scmp.eq.s32.totalorder %s15, 0
      %p108 = por %p106, %p107
      %p109 = scmp.ne.s32.totalorder %s98, %s101
      %p110 = scmp.eq.s32.totalorder %s20, 3
      %p111 = por %p109, %p110
      %p112 = scmp.ne.s32.totalorder %s101, %s102
      %p113 = scmp.eq.s32.totalorder %s20, 0
      %p114 = por %p112, %p113
      %p115 = scmp.ne.s32.totalorder %s101, %s102
      %p116 = scmp.eq.s32.totalorder %s21, 3
      %p117 = por %p115, %p116
      %p119 = scmp.ne.s32.totalorder %s102, %s118
      %p120 = scmp.eq.s32.totalorder %s21, 0
      %p121 = por %p119, %p120
      %s122 = ssub.s32 %s15, %s22
      %p123 = scmp.eq.s32.totalorder %s122, 0
      %s125 = sadd.s32 %s124, 1
      %s126 = scalar_select %p123, %s124, %s125
      %p129 = pneg %p123
      %p130 = scmp.eq.s32.totalorder %s15, 3
      %p131 = por %p129, %p130
      %p132 = scmp.ne.s32.totalorder %s124, %s127
      %p133 = scmp.eq.s32.totalorder %s15, 0
      %p134 = por %p132, %p133
      %p135 = scmp.ne.s32.totalorder %s124, %s127
      %p136 = scmp.eq.s32.totalorder %s20, 3
      %p137 = por %p135, %p136
      %p138 = scmp.ne.s32.totalorder %s127, %s128
      %p139 = scmp.eq.s32.totalorder %s20, 0
      %p140 = por %p138, %p139
      %p141 = scmp.ne.s32.totalorder %s127, %s128
      %p142 = scmp.eq.s32.totalorder %s21, 3
      %p143 = por %p141, %p142
      %p145 = scmp.ne.s32.totalorder %s128, %s144
      %p146 = scmp.eq.s32.totalorder %s21, 0
      %p147 = por %p145, %p146
      %s149 = sadd.s32 %s148, 1
      %p152 = scmp.eq.s32.totalorder %s15, 3
      %p153 = scmp.ne.s32.totalorder %s148, %s150
      %p154 = scmp.eq.s32.totalorder %s15, 0
      %p155 = por %p153, %p154
      %p156 = scmp.ne.s32.totalorder %s148, %s150
      %p157 = scmp.eq.s32.totalorder %s20, 3
      %p158 = por %p156, %p157
      %p159 = scmp.ne.s32.totalorder %s150, %s151
      %p160 = scmp.eq.s32.totalorder %s20, 0
      %p161 = por %p159, %p160
      %p162 = scmp.ne.s32.totalorder %s150, %s151
      %p163 = scmp.eq.s32.totalorder %s21, 3
      %p164 = por %p162, %p163
      %p166 = scmp.ne.s32.totalorder %s151, %s165
      %p167 = scmp.eq.s32.totalorder %s21, 0
      %p168 = por %p166, %p167
      %s169 = ssub.s32 %s15, %s22
      %p170 = scmp.eq.s32.totalorder %s169, 0
      %s172 = sadd.s32 %s171, 1
      %s173 = scalar_select %p170, %s171, %s172
      %p176 = pneg %p170
      %p177 = scmp.eq.s32.totalorder %s15, 3
      %p178 = por %p176, %p177
      %p179 = scmp.ne.s32.totalorder %s171, %s174
      %p180 = scmp.eq.s32.totalorder %s15, 0
      %p181 = por %p179, %p180
      %p182 = scmp.ne.s32.totalorder %s171, %s174
      %p183 = scmp.eq.s32.totalorder %s20, 3
      %p184 = por %p182, %p183
      %p185 = scmp.ne.s32.totalorder %s174, %s175
      %p186 = scmp.eq.s32.totalorder %s20, 0
      %p187 = por %p185, %p186
      %p188 = scmp.ne.s32.totalorder %s174, %s175
      %p189 = scmp.eq.s32.totalorder %s21, 3
      %p190 = por %p188, %p189
      %p192 = scmp.ne.s32.totalorder %s175, %s191
      %p193 = scmp.eq.s32.totalorder %s21, 0
      %p194 = por %p192, %p193
      %p195 = scmp.le.s32.totalorder 1, %s15
      %p196 = scmp.lt.s32.totalorder %s15, 5
      %p197 = pnand %p195, %p196
      %p198 = pneg %p197
      // Predicated region
      $region9: #{tpu_custom_call.1} parent=5 // pred_check
        _
      $region10: #{tpu_custom_call.1} parent=5 // pred_check_branch
        %200 = sbr.rel (%p197) target = $region12
      $region11: #{tpu_custom_call.1} parent=5 // pred_region
        %s201 = ssub.s32 %s15, 1
        // Predicated region
        $region13: #{tpu_custom_call.1} parent=11 // pred_check
          %p202 = pneg %p88
        $region14: #{tpu_custom_call.1} parent=11 // pred_check_branch
          %204 = sbr.rel (%p202) target = $region16
        $region15: #{tpu_custom_call.1} parent=11 // pred_region
          _
        $region16: #{tpu_custom_call.1} parent=11 // pred_fallthru
          _
        // Predicated region
        $region17: #{tpu_custom_call.1} parent=11 // pred_check
          %p205 = pneg %p161
        $region18: #{tpu_custom_call.1} parent=11 // pred_check_branch
          %207 = sbr.rel (%p205) target = $region20
        $region19: #{tpu_custom_call.1} parent=11 // pred_region
          _
        $region20: #{tpu_custom_call.1} parent=11 // pred_fallthru
          _
      $region12: #{tpu_custom_call.1} parent=5 // pred_fallthru
        _
      %p208 = scmp.lt.s32.totalorder %s15, 4
      // Predicated region
      $region21: #{tpu_custom_call.1} parent=5 // pred_check
        %p209 = pneg %p208
      $region22: #{tpu_custom_call.1} parent=5 // pred_check_branch
        %211 = sbr.rel (%p209) target = $region24
      $region23: #{tpu_custom_call.1} parent=5 // pred_region
        // Predicated region
        $region25: #{tpu_custom_call.1} parent=23 // pred_check
          %p212 = pneg %p35
        $region26: #{tpu_custom_call.1} parent=23 // pred_check_branch
          %214 = sbr.rel (%p212) target = $region28
        $region27: #{tpu_custom_call.1} parent=23 // pred_region
          %p215 = scmp.lt.s32.totalorder %s15, 3
          %s216 = scalar_select %p215, %s15, 3
          %s217 = smul.addr %s216, 4
          %s218 = scalar_lea.vmem %s0, %s217
        $region28: #{tpu_custom_call.1} parent=23 // pred_fallthru
          _
        // Predicated region
        $region29: #{tpu_custom_call.1} parent=23 // pred_check
          %p219 = pneg %p61
        $region30: #{tpu_custom_call.1} parent=23 // pred_check_branch
          %221 = sbr.rel (%p219) target = $region32
        $region31: #{tpu_custom_call.1} parent=23 // pred_region
          %p222 = scmp.lt.s32.totalorder %s15, 3
          %s223 = scalar_select %p222, %s15, 3
          %s224 = smul.addr %s223, 4
          %s225 = scalar_lea.vmem %s1, %s224
        $region32: #{tpu_custom_call.1} parent=23 // pred_fallthru
          _
        // Predicated region
        $region33: #{tpu_custom_call.1} parent=23 // pred_check
          %p226 = pneg %p108
        $region34: #{tpu_custom_call.1} parent=23 // pred_check_branch
          %228 = sbr.rel (%p226) target = $region36
        $region35: #{tpu_custom_call.1} parent=23 // pred_region
          %p229 = scmp.lt.s32.totalorder %s15, 3
          %s230 = scalar_select %p229, %s15, 3
          %s231 = smul.addr %s230, 15
          %s232 = smul.addr %s231, 8
          %s233 = scalar_lea.vmem %s3, %s232
        $region36: #{tpu_custom_call.1} parent=23 // pred_fallthru
          _
        // Predicated region
        $region37: #{tpu_custom_call.1} parent=23 // pred_check
          %p234 = pneg %p134
        $region38: #{tpu_custom_call.1} parent=23 // pred_check_branch
          %236 = sbr.rel (%p234) target = $region40
        $region39: #{tpu_custom_call.1} parent=23 // pred_region
          %p237 = scmp.lt.s32.totalorder %s15, 3
          %s238 = scalar_select %p237, %s15, 3
          %s239 = scalar_lea.vmem %s4, %s238
        $region40: #{tpu_custom_call.1} parent=23 // pred_fallthru
          _
      $region24: #{tpu_custom_call.1} parent=5 // pred_fallthru
        _
      %p240 = scmp.le.s32.totalorder 1, %s15
      %p241 = scmp.lt.s32.totalorder %s15, 5
      %p242 = pnand %p240, %p241
      %p243 = pneg %p242
      // Predicated region
      $region41: #{tpu_custom_call.1} parent=5 // pred_check
        _
      $region42: #{tpu_custom_call.1} parent=5 // pred_check_branch
        %245 = sbr.rel (%p242) target = $region44
      $region43: #{tpu_custom_call.1} parent=5 // pred_region
        %s246 = ssub.s32 %s15, 1
        %p247 = scmp.lt.s32.totalorder %s20, 3
        %s248 = scalar_select %p247, %s20, 3
        %s249 = smul.addr %s248, 4
        %s250 = scalar_lea.vmem %s0, %s249
        %p251 = pneg %p41
        %p252 = pneg %p38
        %p253 = scmp.lt.s32.totalorder %s20, 3
        %s254 = scalar_select %p253, %s20, 3
        %s255 = smul.addr %s254, 4
        %s256 = scalar_lea.vmem %s1, %s255
        %p257 = pneg %p67
        %p258 = pneg %p64
        %p259 = pneg %p88
        %p260 = pneg %p85
        %p261 = scmp.lt.s32.totalorder %s20, 3
        %s262 = scalar_select %p261, %s20, 3
        %s263 = smul.addr %s262, 15
        %s264 = smul.addr %s263, 8
        %s265 = scalar_lea.vmem %s3, %s264
        %p266 = pneg %p114
        %p267 = pneg %p111
        %p268 = scmp.lt.s32.totalorder %s20, 3
        %s269 = scalar_select %p268, %s20, 3
        %s270 = scalar_lea.vmem %s4, %s269
        %p271 = pneg %p140
        %p272 = pneg %p137
        %p273 = pneg %p161
        %p274 = pneg %p158
        %p275 = pneg %p187
        %p276 = pneg %p184
        %s277 = sand.u32 %s174, 1
        %s278 = scalar_lea.sflag [#allocation3], %s277
        %s279 = sand.u32 %s174, 1
        %s280 = scalar_lea.vmem [#allocation2], %s279
        %p281 = scmp.lt.s32.totalorder %s20, 3
        %s282 = scalar_select %p281, %s20, 3
        %s283 = smul.addr %s282, 4
        %s284 = scalar_lea.vmem %s0, %s283
        %p285 = scmp.lt.s32.totalorder %s20, 3
        %s286 = scalar_select %p285, %s20, 3
        %s287 = smul.addr %s286, 4
        %s288 = scalar_lea.vmem %s1, %s287
        %p289 = scmp.lt.s32.totalorder %s20, 3
        %s290 = scalar_select %p289, %s20, 3
        %s291 = smul.addr %s290, 15
        %s292 = smul.addr %s291, 8
        %s293 = scalar_lea.vmem %s3, %s292
        %p294 = scmp.lt.s32.totalorder %s20, 3
        %s295 = scalar_select %p294, %s20, 3
        %s296 = scalar_lea.vmem %s4, %s295
        %v297 = vld [vmem:[%s284] sm:$0xf]
        %v298 = vld [vmem:[%s288] sm:$0xf]
        %v299 = vand.u32 2147483647, %v297
        %v300 = vsub.f32 0.0, %v299
        %v301 = vmul.f32 %v300, 1.442695
        %v302 = vpow.pop %v301
        %v303 = vadd.f32 %v302, 1.0
        %v304 = vrcp.pop %v303
        %vm305 = vcmp.ge.f32.partialorder %v297, 0.0
        %v306 = vmul.f32 %v302, %v304
        %v307 = vsel %vm305, %v304, %v306
        %v308 = vmax.f32 %v297, 0.0
        %v309 = vmul.f32 %v297, %v298
        %v310 = vsub.f32 %v308, %v309
        %v311 = vlog2.pop %v303
        %v312 = vmul.f32 %v311, 0.6931472
        %v313 = vadd.f32 %v310, %v312
        %v314 = vmul.f32 %v307, %v298
        %v315 = vsub.f32 1.0, %v307
        %v316 = vsub.f32 1.0, %v298
        %v317 = vmul.f32 %v315, %v316
        %v318 = vadd.f32 %v314, %v317
        %v319 = vsub.f32 1.0, %v318
        %v320 = vmul.f32 %v319, %v319
        %v321 = vmul.f32 %v320, %v313
        %v322 = vmul.f32 %v298, 0.25
        %v323 = vmul.f32 %v316, 0.75
        %v324 = vadd.f32 %v322, %v323
        %v325 = vmul.f32 %v324, %v321
        %vm326 = vcmask 125952
        %v327 = vsel %vm326, %v325, 0.0
        %328 = vadd.xlane.f32.xlu0 %v327
        %v329 = vpop.xlane.xlu0 %328
        %v330 = vrot.slane %v329, 4
        %v331 = vadd.f32 %v329, %v330
        %v332 = vrot.slane %v331, 2
        %v333 = vadd.f32 %v331, %v332
        %v334 = vrot.slane %v333, 1
        %v335 = vadd.f32 %v333, %v334
        %s336 = vtos %v335
        %v337 = vlaneseq
        %v338 = vshrl.u32 %v337, 7
        %vm339 = vcmp.eq.s32.totalorder %v338, 1
        %vm340 = vcmp.ge.s32.totalorder %v338, 0
        %vm341 = vcmp.lt.s32.totalorder %v338, 1
        %vm342 = vmand %vm340, %vm341
        %v343 = vsel %vm339, %v297, -inf
        %v344 = vsel %vm326, %v343, -inf
        %v345 = vrot.slane %v344, 4
        %v346 = vmax.f32 %v344, %v345
        %v347 = vrot.slane %v346, 2
        %v348 = vmax.f32 %v346, %v347
        %v349 = vrot.slane %v348, 1
        %v350 = vmax.f32 %v348, %v349
        %v351 = vsel %vm342, %v297, -inf
        %v352 = vsel %vm326, %v351, -inf
        %v353 = vrot.slane %v352, 4
        %v354 = vmax.f32 %v352, %v353
        %v355 = vrot.slane %v354, 2
        %v356 = vmax.f32 %v354, %v355
        %v357 = vrot.slane %v356, 1
        %v358 = vmax.f32 %v356, %v357
        %vm359 = vcmp.ge.f32.partialorder %v358, %v350
        %v360 = vsel %vm359, 1, 0
        %v361 = vcvt.s32.f32 %v360
        %vm362 = vcmask 130048
        %v363 = vsel %vm362, %v361, 0.0
        %364 = vadd.xlane.f32.xlu0 %v363
        %v365 = vpop.xlane.xlu0 %364
        %v366 = vld [vmem:[%s2] sm:$0x1]
        %v367 = vsub.f32 %v365, %v366
        %v368 = vand.u32 2147483647, %v367
        %v369 = vadd.f32 %v368, 0.0
        %vm370 = vcmp.eq.s32.totalorder %v338, 3
        %vm371 = vcmp.ge.s32.totalorder %v338, 2
        %vm372 = vcmp.lt.s32.totalorder %v338, 3
        %vm373 = vmand %vm371, %vm372
        %v374 = vsel %vm370, %v297, -inf
        %v375 = vsel %vm326, %v374, -inf
        %v376 = vrot.slane %v375, 4
        %v377 = vmax.f32 %v375, %v376
        %v378 = vrot.slane %v377, 2
        %v379 = vmax.f32 %v377, %v378
        %v380 = vrot.slane %v379, 1
        %v381 = vmax.f32 %v379, %v380
        %v382 = vsel %vm373, %v297, -inf
        %v383 = vsel %vm326, %v382, -inf
        %v384 = vrot.slane %v383, 4
        %v385 = vmax.f32 %v383, %v384
        %v386 = vrot.slane %v385, 2
        %v387 = vmax.f32 %v385, %v386
        %v388 = vrot.slane %v387, 1
        %v389 = vmax.f32 %v387, %v388
        %vm390 = vcmp.ge.f32.partialorder %v389, %v381
        %v391 = vsel %vm390, 1, 0
        %v392 = vcvt.s32.f32 %v391
        %v393 = vsel %vm362, %v392, 0.0
        %394 = vadd.xlane.f32.xlu0 %v393
        %v395 = vpop.xlane.xlu0 %394
        %v396 = vld [vmem:[%s2 + $0x1] sm:$0x1]
        %v397 = vsub.f32 %v395, %v396
        %v398 = vand.u32 2147483647, %v397
        %v399 = vadd.f32 %v369, %v398
        %v400 = vadd.f32 %v399, 0.0
        %s401 = vtos %v400
        %v402 = vrcp.pop 2.0
        %s403 = vtos %v402
        %s404 = smul.f32 %s401, %s403
        %v405 = vld [vmem:[%s293] sm:$0xff]
        %v406 = vld [vmem:[%s293 + $0x8] sm:$0xff]
        %v407 = vld [vmem:[%s293 + $0x10] sm:$0x1]
        %v408 = vld [vmem:[%s293 + $0x18] sm:$0xff]
        %v409 = vld [vmem:[%s293 + $0x20] sm:$0xff]
        %v410 = vld [vmem:[%s293 + $0x28] sm:$0x1]
        %v411 = vld [vmem:[%s293 + $0x30] sm:$0xff]
        %v412 = vld [vmem:[%s293 + $0x38] sm:$0xff]
        %v413 = vld [vmem:[%s293 + $0x40] sm:$0x1]
        %v414 = vld [vmem:[%s293 + $0x48] sm:$0xff]
        %v415 = vld [vmem:[%s293 + $0x50] sm:$0xff]
        %v416 = vld [vmem:[%s293 + $0x58] sm:$0x1]
        %v417 = vld [vmem:[%s293 + $0x60] sm:$0xff]
        %v418 = vld [vmem:[%s293 + $0x68] sm:$0xff]
        %v419 = vld [vmem:[%s293 + $0x70] sm:$0x1]
        %v420 = vsub.f32 %v405, %v411
        %v421 = vsub.f32 %v406, %v412
        %v422 = vsub.f32 %v407, %v413
        %v423 = vsub.f32 %v408, %v414
        %v424 = vsub.f32 %v409, %v415
        %v425 = vsub.f32 %v410, %v416
        %v426 = vand.u32 2147483647, %v420
        %v427 = vand.u32 2147483647, %v421
        %v428 = vand.u32 2147483647, %v422
        %v429 = vand.u32 2147483647, %v423
        %v430 = vand.u32 2147483647, %v424
        %v431 = vand.u32 2147483647, %v425
        %v432 = vadd.f32 %v426, %v429
        %v433 = vadd.f32 %v427, %v430
        %v434 = vadd.f32 %v428, %v431
        %v435 = vmul.f32 %v432, %v417
        %v436 = vmul.f32 %v433, %v418
        %v437 = vmul.f32 %v434, %v419
        %vm438 = vcmask 48128
        %v439 = vsel %vm438, %v435, 0.0
        %v440 = vsel %vm438, %v436, 0.0
        %v441 = vadd.f32 %v439, %v440
        %vm442 = vcmask 40960
        %v443 = vsel %vm442, %v437, 0.0
        %v444 = vadd.f32 %v441, %v443
        %445 = vadd.xlane.f32.xlu0 %v444
        %v446 = vpop.xlane.xlu0 %445
        %v447 = vrot.slane %v446, 4
        %v448 = vadd.f32 %v446, %v447
        %v449 = vrot.slane %v448, 2
        %v450 = vadd.f32 %v448, %v449
        %v451 = vrot.slane %v450, 1
        %v452 = vadd.f32 %v450, %v451
        %s453 = vtos %v452
        %v454 = vld [vmem:[%s5] sm:$0xff]
        %v455 = vld [vmem:[%s5 + $0x8] sm:$0xff]
        %v456 = vld [vmem:[%s5 + $0x10] sm:$0x1]
        %v457 = vld [vmem:[%s296] sm:$0x1]
        %459 = vset.pattern.permute.xlu0 0
        %460 = vperm.xlu0 %459, %v454
        %v461 = vpop.permute.xlu0 %460
        %464 = vset.pattern.permute.xlu0 0
        %465 = vperm.xlu0 %464, %v455
        %v466 = vpop.permute.xlu0 %465
        %469 = vset.pattern.permute.xlu0 0
        %470 = vperm.xlu0 %469, %v456
        %v471 = vpop.permute.xlu0 %470
        %v474 = vlaneseq
        %v475 = vshrl.u32 %v474, 7
        %v476 = vsub.s32 0, %v475
        %v477 = vrot.slane %v457, %v476
        %v479 = vmul.f32 %v461, %v477
        %v480 = vmul.f32 %v466, %v477
        %v481 = vmul.f32 %v471, %v477
        %v482 = vmul.f32 %v420, %v420
        %v483 = vmul.f32 %v421, %v421
        %v484 = vmul.f32 %v422, %v422
        %v485 = vmul.f32 %v423, %v423
        %v486 = vmul.f32 %v424, %v424
        %v487 = vmul.f32 %v425, %v425
        %v488 = vadd.f32 %v482, %v485
        %v489 = vadd.f32 %v483, %v486
        %v490 = vadd.f32 %v484, %v487
        %v491 = vsub.f32 0.0, %v488
        %v492 = vsub.f32 0.0, %v489
        %v493 = vsub.f32 0.0, %v490
        %v494 = vmul.f32 %v491, %v479
        %v495 = vmul.f32 %v492, %v480
        %v496 = vmul.f32 %v493, %v481
        %v497 = vmul.f32 %v494, 1.442695
        %v498 = vpow.pop %v497
        %v499 = vmul.f32 %v495, 1.442695
        %v500 = vpow.pop %v499
        %v501 = vmul.f32 %v496, 1.442695
        %v502 = vpow.pop %v501
        %v503 = vmul.f32 %v498, %v417
        %v504 = vmul.f32 %v500, %v418
        %v505 = vmul.f32 %v502, %v419
        %v506 = vsel %vm438, %v503, 0.0
        %v507 = vsel %vm438, %v504, 0.0
        %v508 = vadd.f32 %v506, %v507
        %v509 = vsel %vm442, %v505, 0.0
        %v510 = vadd.f32 %v508, %v509
        %v511 = vrot.slane %v510, 4
        %v512 = vadd.f32 %v510, %v511
        %v513 = vrot.slane %v512, 2
        %v514 = vadd.f32 %v512, %v513
        %v515 = vrot.slane %v514, 1
        %v516 = vadd.f32 %v514, %v515
        %v517 = vsel %vm438, %v417, 0.0
        %v518 = vsel %vm438, %v418, 0.0
        %v519 = vadd.f32 %v517, %v518
        %v520 = vsel %vm442, %v419, 0.0
        %v521 = vadd.f32 %v519, %v520
        %v522 = vrot.slane %v521, 4
        %v523 = vadd.f32 %v521, %v522
        %v524 = vrot.slane %v523, 2
        %v525 = vadd.f32 %v523, %v524
        %v526 = vrot.slane %v525, 1
        %v527 = vadd.f32 %v525, %v526
        %v528 = vadd.f32 %v527, 1e-06
        %v529 = vrcp.pop %v528
        %v530 = vmul.f32 %v516, %v529
        %v531 = vmax.f32 %v530, 1e-06
        %v532 = vsub.f32 1.0, %v531
        %v533 = vsel %vm442, %v532, 0.0
        %534 = vadd.xlane.f32.xlu0 %v533
        %v535 = vpop.xlane.xlu0 %534
        %v536 = vrot.slane %v535, 4
        %v537 = vadd.f32 %v535, %v536
        %v538 = vrot.slane %v537, 2
        %v539 = vadd.f32 %v537, %v538
        %v540 = vrot.slane %v539, 1
        %v541 = vadd.f32 %v539, %v540
        %s542 = vtos %v541
        %v543 = vrcp.pop 6.0
        %s544 = vtos %v543
        %s545 = smul.f32 %s542, %s544
        %v546 = vlaneseq
        %v547 = vand.u32 %v546, 127
        %vm548 = vcmp.eq.s32.totalorder %v547, 0
        %vm549 = vcmp.eq.s32.totalorder %v547, 1
        %vm550 = vcmp.eq.s32.totalorder %v547, 2
        %v551 = vstv %s453
        %v552 = vstv %s545
        %v553 = vsel %vm550, %v551, %v552
        %v554 = vstv %s404
        %v555 = vsel %vm549, %v554, %v553
        %v556 = vstv %s336
        %v557 = vsel %vm548, %v556, %v555
        %558 = vst [vmem:[%s280] sm:$0x1] %v557
        %s559 = sand.u32 %s174, 1
        %s560 = scalar_lea.sflag [#allocation3], %s559
        %s561 = sand.u32 %s174, 1
        %s562 = scalar_lea.vmem [#allocation2], %s561
        // Predicated region
        $region45: #{tpu_custom_call.1} parent=43 // pred_check
          %p563 = pneg %p184
        $region46: #{tpu_custom_call.1} parent=43 // pred_check_branch
          %565 = sbr.rel (%p563) target = $region48
        $region47: #{tpu_custom_call.1} parent=43 // pred_region
          %s567 = ssub.s32 16, 16
          %568 = vsyncadd %s560, %s567
          %s569 = smul.addr %s20, 16
          %s570 = scalar_lea.hbm %s6, %s569
          %s572 = sshll.u32 %s562, 4
          %s573 = int_to_ptr.vmem [resolvable:$true] %s572
          %575 = dma.vmem_to_hbm [thread:$0]  %s573, 16, %s570, %s560
        $region48: #{tpu_custom_call.1} parent=43 // pred_fallthru
          _
      $region44: #{tpu_custom_call.1} parent=5 // pred_fallthru
        _
      %p576 = scmp.le.s32.totalorder 2, %s15
      // Predicated region
      $region49: #{tpu_custom_call.1} parent=5 // pred_check
        %p577 = pneg %p576
      $region50: #{tpu_custom_call.1} parent=5 // pred_check_branch
        %579 = sbr.rel (%p577) target = $region52
      $region51: #{tpu_custom_call.1} parent=5 // pred_region
        %s580 = ssub.s32 %s15, 2
        // Predicated region
        $region53: #{tpu_custom_call.1} parent=51 // pred_check
          %p581 = pneg %p190
        $region54: #{tpu_custom_call.1} parent=51 // pred_check_branch
          %583 = sbr.rel (%p581) target = $region56
        $region55: #{tpu_custom_call.1} parent=51 // pred_region
          %s584 = sand.u32 %s175, 1
          %s585 = scalar_lea.sflag [#allocation3], %s584
          %s586 = sand.u32 %s175, 1
          %s587 = scalar_lea.vmem [#allocation2], %s586
          %588 = dma.done %s585, 16
        $region56: #{tpu_custom_call.1} parent=51 // pred_fallthru
          _
      $region52: #{tpu_custom_call.1} parent=5 // pred_fallthru
        _
    $region6: #{tpu_custom_call.1} parent=1 // loop_footer
      %s19 = sadd.s32 1, %s15
    $region7: #{tpu_custom_call.1} parent=1 // loop_footer_branch
      %14 = sbr.rel target = $region3
    $region8: #{tpu_custom_call.1} parent=1 // loop_exit
      _
    %589 = vsyncpa [#allocation3], 1
    %s590 = scalar_lea.sflag [#allocation3], 1
    %591 = vsyncpa %s590, 1

</llo_original>
